<compile_context>
chip_gen: v7x
topology: tpu7x:2x2x1
jax: 0.10.0
libtpu: 0.0.40
codegen_flags: <defaults>
</compile_context>

<pallas_src>
import functools

import numpy as np
import jax
import jax.numpy as jnp
from jax.experimental import pallas as pl
from jax.experimental.pallas import tpu as pltpu

_EPS = 1e-5
_MAX_TILE_M = 16384              # lane tile (multiple of 128); ~5 MiB peak VMEM per grid step
                                 # at 16 output channels incl. double buffering -> safe on all gens
_VMEM_LIMIT = 32 * 1024 * 1024


def _round_up(x, m):
    return (x + m - 1) // m * m


def _pick_tiling(m):
    """Lane axis is the flattened B*N. Pad to a multiple of 128, then split into <=_MAX_TILE_M
    tiles sized so total padding waste stays below 128 lanes per grid step."""
    m_pad = _round_up(max(m, 1), 128)
    if m_pad <= _MAX_TILE_M:
        return m_pad, m_pad, 1
    t = -(-m_pad // _MAX_TILE_M)                 # number of tiles
    tile = _round_up(-(-m_pad // t), 128)        # <= _MAX_TILE_M, multiple of 128
    return tile, tile * t, t


# --------------------------------------------------------------------------------------
# parameters
# --------------------------------------------------------------------------------------
def init_params(key, in_channel, out_channel, hidden_unit=(8, 8)):
    """PyTorch-like init: Conv1d weight/bias uniform(+-1/sqrt(fan_in)), BN gamma=1, beta=0.
    Weights stored as [C_out, C_in] (Conv1d weight with the k=1 axis squeezed)."""
    hidden_unit = list(hidden_unit) if hidden_unit else []
    dims = [in_channel] + hidden_unit + [out_channel]
    n_layers = len(dims) - 1
    w, b, g, be = [], [], [], []
    for l in range(n_layers):
        cin, cout = dims[l], dims[l + 1]
        key, kw, kb = jax.random.split(key, 3)
        bound = 1.0 / np.sqrt(cin)
        w.append(jax.random.uniform(kw, (cout, cin), jnp.float32, -bound, bound))
        b.append(jax.random.uniform(kb, (cout,), jnp.float32, -bound, bound))
        g.append(jnp.ones((cout,), jnp.float32))
        be.append(jnp.zeros((cout,), jnp.float32))
    return {"dims": tuple(dims), "w": w, "b": b, "g": g, "be": be}


def _pack_slab(dims, ws, bs):
    """Pack weights [cout, cin] and biases [cout] of layers 0..len(ws)-1 into one small f32
    slab [rows, cols] (single tiny DMA per grid step instead of many padded tiles)."""
    n = len(ws)
    rows = _round_up(max(dims[j + 1] for j in range(n)), 8)
    w_cols, b_cols = [], []
    col = 0
    for j in range(n):
        w_cols.append(col)
        col += dims[j]
        b_cols.append(col)
        col += 1
    slab = jnp.zeros((rows, col), jnp.float32)
    for j in range(n):
        cout, cin = dims[j + 1], dims[j]
        slab = slab.at[:cout, w_cols[j]:w_cols[j] + cin].set(ws[j])
        slab = slab.at[:cout, b_cols[j]].set(bs[j])
    return slab, tuple(w_cols), tuple(b_cols)


# --------------------------------------------------------------------------------------
# in-kernel helpers (channels on sublanes, flattened points on lanes)
# --------------------------------------------------------------------------------------
def _conv1x1(p_ref, h, cin, cout, w_col, b_col):
    """y[co, m] = b[co] + sum_ci W[co, ci] * h[ci, m] -- pure VPU broadcast MACs.
    K is tiny (3/8), so this beats padding a 128/256-wide MXU; output stays lane-dense.
    The [cout, cin] weight block and bias column are loaded ONCE per layer per tile."""
    w = p_ref[0:cout, w_col:w_col + cin]                       # [cout, cin]  hoisted load
    y = p_ref[0:cout, b_col:b_col + 1]                         # [cout, 1]    bias
    for ci in range(cin):                                      # static, fully unrolled
        y = y + w[:, ci:ci + 1] * h[ci:ci + 1, :]              # sublane x lane broadcasts
    return y


def _folded_chain(p_ref, h, dims, w_cols, b_cols, n_layers):
    """Apply n_layers of (conv1x1 with BatchNorm pre-folded into W, b) + ReLU."""
    for j in range(n_layers):
        y = _conv1x1(p_ref, h, dims[j], dims[j + 1], w_cols[j], b_cols[j])
        h = jnp.maximum(y, 0.0)
    return h


# --------------------------------------------------------------------------------------
# stats kernel: per-tile partial sum / sum-of-squares of layer `layer`'s raw conv output
# --------------------------------------------------------------------------------------
def _stats_kernel(x_ref, p_ref, acc_ref, *, dims, w_cols, b_cols, layer, tile_m, m_valid, c_pad):
    t = pl.program_id(0)
    h = x_ref[...]                                             # [C_in, tile_m]  lane-dense
    h = _folded_chain(p_ref, h, dims, w_cols, b_cols, layer)   # recompute earlier layers (folded)
    cout = dims[layer + 1]
    y = _conv1x1(p_ref, h, dims[layer], cout,                  # raw conv output (pre-BN)
                 w_cols[layer], b_cols[layer])

    # mask padded lanes out of the statistics (only traced when padding exists)
    if m_valid % tile_m != 0:
        lane = jax.lax.broadcasted_iota(jnp.int32, (1, tile_m), 1)
        y = jnp.where(t * tile_m + lane < m_valid, y, 0.0)

    # 128-lane-wide partials: plain VPU adds, unmasked lane-dense stores; the final 128->1
    # (and across-tile) reduction happens once in the wrapper.
    s = y[:, 0:128]
    ss = s * s
    for k in range(1, tile_m // 128):
        yk = y[:, k * 128:(k + 1) * 128]
        s = s + yk
        ss = ss + yk * yk
    acc_ref[0, 0:cout, :] = s
    acc_ref[1, 0:cout, :] = ss
    if c_pad > cout:                                           # keep padded rows deterministic
        acc_ref[0, cout:c_pad, :] = jnp.zeros((c_pad - cout, 128), jnp.float32)
        acc_ref[1, cout:c_pad, :] = jnp.zeros((c_pad - cout, 128), jnp.float32)


# --------------------------------------------------------------------------------------
# apply kernel: full folded conv+BN+ReLU chain, lane-dense output written once
# --------------------------------------------------------------------------------------
def _apply_kernel(x_ref, p_ref, o_ref, *, dims, w_cols, b_cols):
    h = x_ref[...]                                             # [C_in, tile_m]
    h = _folded_chain(p_ref, h, dims, w_cols, b_cols, len(dims) - 1)
    o_ref[...] = h.astype(o_ref.dtype)                         # [C_out, tile_m] lane-dense


# --------------------------------------------------------------------------------------
# pallas_call wrappers
# --------------------------------------------------------------------------------------
def _stats_pass(x_flat, slab, w_cols, b_cols, dims, layer, tile_m, t_steps, m_valid):
    c_in = dims[0]
    c_pad = _round_up(dims[layer + 1], 8)
    pts = x_flat.shape[1]
    macs = sum(dims[j] * dims[j + 1] for j in range(layer + 1))
    kern = functools.partial(_stats_kernel, dims=dims, w_cols=w_cols, b_cols=b_cols,
                             layer=layer, tile_m=tile_m, m_valid=m_valid, c_pad=c_pad)
    return pl.pallas_call(
        kern,
        out_shape=jax.ShapeDtypeStruct((t_steps, 2, c_pad, 128), jnp.float32),
        grid=(t_steps,),
        in_specs=[
            pl.BlockSpec((c_in, tile_m), lambda t: (0, t)),
            pl.BlockSpec(slab.shape, lambda t: (0, 0)),        # packed params, constant block
        ],
        out_specs=pl.BlockSpec((None, 2, c_pad, 128), lambda t: (t, 0, 0, 0)),
        compiler_params=pltpu.CompilerParams(
            dimension_semantics=("parallel",),                 # per-tile partials -> no races
            vmem_limit_bytes=_VMEM_LIMIT),
        cost_estimate=pl.CostEstimate(
            flops=int(pts * (2 * macs + 3 * dims[layer + 1])),
            transcendentals=0,
            bytes_accessed=int(4 * (pts * c_in + slab.size + t_steps * 2 * c_pad * 128))),
    )(x_flat, slab)


def _apply_pass(x_flat, slab, w_cols, b_cols, dims, tile_m, t_steps):
    c_in, c_out = dims[0], dims[-1]
    m_total = x_flat.shape[1]
    macs = sum(dims[j] * dims[j + 1] for j in range(len(dims) - 1))
    kern = functools.partial(_apply_kernel, dims=dims, w_cols=w_cols, b_cols=b_cols)
    return pl.pallas_call(
        kern,
        out_shape=jax.ShapeDtypeStruct((c_out, m_total), jnp.float32),
        grid=(t_steps,),
        in_specs=[
            pl.BlockSpec((c_in, tile_m), lambda t: (0, t)),
            pl.BlockSpec(slab.shape, lambda t: (0, 0)),
        ],
        out_specs=pl.BlockSpec((c_out, tile_m), lambda t: (0, t)),
        compiler_params=pltpu.CompilerParams(
            dimension_semantics=("parallel",),
            vmem_limit_bytes=_VMEM_LIMIT),
        cost_estimate=pl.CostEstimate(
            flops=int(m_total * (2 * macs + sum(dims[1:]))),
            transcendentals=0,
            bytes_accessed=int(4 * (m_total * (c_in + c_out) + slab.size))),
    )(x_flat, slab)


# --------------------------------------------------------------------------------------
# forward
# --------------------------------------------------------------------------------------
def weightnet_forward(x, params):
    """x: [B, C_in, N] float32 (NCW). Returns [B, C_out, N] float32 (training-mode BN)."""
    B, C_in, N = x.shape
    dims = params["dims"]
    assert dims[0] == C_in, (dims, C_in)
    n_layers = len(dims) - 1
    c_out = dims[-1]

    m_valid = B * N
    tile_m, m_total, t_steps = _pick_tiling(m_valid)
    count = float(m_valid)                                     # BN stats over (B, N)

    # Flatten to [C_in, B*N] once (lane packing) and pad to the tiled width; the pad is fused
    # into this single materialization, so no extra HBM pass is added for padding.
    x_flat = jnp.transpose(x, (1, 0, 2)).reshape(C_in, m_valid)
    if m_total != m_valid:
        x_flat = jnp.pad(x_flat, ((0, 0), (0, m_total - m_valid)))

    # One stats call per layer; fold BatchNorm into the conv weights between calls so every
    # per-element kernel op is a MAC or a ReLU.
    w_f, b_f = [], []
    for l in range(n_layers):
        slab, w_cols, b_cols = _pack_slab(dims, w_f + [params["w"][l]], b_f + [params["b"][l]])
        stats = _stats_pass(x_flat, slab, w_cols, b_cols, dims, l, tile_m, t_steps, m_valid)
        red = jnp.sum(stats, axis=(0, 3))                      # [2, c_pad]  tiny reduction
        cout = dims[l + 1]
        mean = red[0, :cout] / count
        # TODO(synk): E[y^2]-E[y]^2 in f32 can lose precision for very large B*N; a per-tile
        #             centered / Welford-style accumulation would be more robust at that scale.
        var = jnp.maximum(red[1, :cout] / count - mean * mean, 0.0)
        scale = params["g"][l] / jnp.sqrt(var + jnp.float32(_EPS))
        shift = params["be"][l] - mean * scale
        w_f.append(params["w"][l] * scale[:, None])            # fold BN into conv
        b_f.append(params["b"][l] * scale + shift)

    slab, w_cols, b_cols = _pack_slab(dims, w_f, b_f)
    out_flat = _apply_pass(x_flat, slab, w_cols, b_cols, dims, tile_m, t_steps)

    out = out_flat[:, :m_valid].reshape(c_out, B, N).transpose(1, 0, 2)
    return out


# --------------------------------------------------------------------------------------
# pure-JAX reference (same math, for a correctness check)
# --------------------------------------------------------------------------------------
def reference_forward(x, params):
    dims = params["dims"]
    n_layers = len(dims) - 1
    h = x.astype(jnp.float32)                                  # [B, C, N]
    for l in range(n_layers):
        w = params["w"][l]                                     # [cout, cin]
        y = jnp.einsum("oc,bcn->bon", w, h) + params["b"][l][None, :, None]
        mean = jnp.mean(y, axis=(0, 2), keepdims=True)
        var = jnp.mean((y - mean) ** 2, axis=(0, 2), keepdims=True)
        y = (y - mean) / jnp.sqrt(var + _EPS)
        h = jnp.maximum(y * params["g"][l][None, :, None] + params["be"][l][None, :, None], 0.0)
    return h


if __name__ == "__main__":
    key = jax.random.PRNGKey(0)
    key_x, key_p = jax.random.split(key)

    B, C_in, N = 2, 3, 16          # localized_xyz: [B, 3, N]
    C_out = 16                     # out_channel (C_mid)

    params = init_params(key_p, C_in, C_out, hidden_unit=(8, 8))
    x = jax.random.normal(key_x, (B, C_in, N), dtype=jnp.float32)

    out = weightnet_forward(x, params)
    out = jax.block_until_ready(out)

    ref = reference_forward(x, params)
    assert out.shape == (B, C_out, N), out.shape
    assert jnp.allclose(out, ref, atol=1e-4, rtol=1e-4), "kernel mismatch vs reference"

    print("KERNEL_OK")
</pallas_src>

<mosaic_0001>
module attributes {stable_mosaic.version = 11 : i64} {
  func.func @_stats_kernel(%arg0: i32, %arg1: memref<3x128xf32, #tpu.memory_space<vmem>>, %arg2: memref<8x4xf32, #tpu.memory_space<vmem>>, %arg3: memref<1x2x8x128xf32, #tpu.memory_space<vmem>>) attributes {dimension_semantics = [#tpu.dimension_semantics<parallel>], iteration_bounds = array<i64: 1>, scalar_prefetch = 0 : i64, scratch_operands = 0 : i64, tpu.core_type = #tpu.core_type<tc>, window_params = [{transform_indices = @transform_0, window_bounds = array<i64: 3, 128>}, {pipeline_mode = #tpu.pipeline_mode<synchronous>, transform_indices = @transform_1, window_bounds = array<i64: 8, 4>}, {transform_indices = @transform_2, window_bounds = array<i64: 1, 2, 8, 128>}]} {
    %c0 = arith.constant 0 : index
    %c0_0 = arith.constant 0 : index
    %0 = vector.load %arg1[%c0, %c0_0] : memref<3x128xf32, #tpu.memory_space<vmem>>, vector<3x128xf32>
    %c0_1 = arith.constant 0 : index
    %c0_2 = arith.constant 0 : index
    %1 = vector.load %arg2[%c0_1, %c0_2] : memref<8x4xf32, #tpu.memory_space<vmem>>, vector<8x3xf32>
    %c0_3 = arith.constant 0 : index
    %c3 = arith.constant 3 : index
    %2 = vector.load %arg2[%c0_3, %c3] : memref<8x4xf32, #tpu.memory_space<vmem>>, vector<8x1xf32>
    %3 = vector.extract_strided_slice %1 {offsets = [0, 0], sizes = [8, 1], strides = [1, 1]} : vector<8x3xf32> to vector<8x1xf32>
    %4 = vector.extract_strided_slice %0 {offsets = [0, 0], sizes = [1, 128], strides = [1, 1]} : vector<3x128xf32> to vector<1x128xf32>
    %5 = vector.broadcast %3 : vector<8x1xf32> to vector<8x128xf32>
    %6 = vector.broadcast %4 : vector<1x128xf32> to vector<8x128xf32>
    %7 = arith.mulf %5, %6 : vector<8x128xf32>
    %8 = vector.broadcast %2 : vector<8x1xf32> to vector<8x128xf32>
    %9 = arith.addf %8, %7 : vector<8x128xf32>
    %10 = vector.extract_strided_slice %1 {offsets = [0, 1], sizes = [8, 1], strides = [1, 1]} : vector<8x3xf32> to vector<8x1xf32>
    %11 = vector.extract_strided_slice %0 {offsets = [1, 0], sizes = [1, 128], strides = [1, 1]} : vector<3x128xf32> to vector<1x128xf32>
    %12 = vector.broadcast %10 : vector<8x1xf32> to vector<8x128xf32>
    %13 = vector.broadcast %11 : vector<1x128xf32> to vector<8x128xf32>
    %14 = arith.mulf %12, %13 : vector<8x128xf32>
    %15 = arith.addf %9, %14 : vector<8x128xf32>
    %16 = vector.extract_strided_slice %1 {offsets = [0, 2], sizes = [8, 1], strides = [1, 1]} : vector<8x3xf32> to vector<8x1xf32>
    %17 = vector.extract_strided_slice %0 {offsets = [2, 0], sizes = [1, 128], strides = [1, 1]} : vector<3x128xf32> to vector<1x128xf32>
    %18 = vector.broadcast %16 : vector<8x1xf32> to vector<8x128xf32>
    %19 = vector.broadcast %17 : vector<1x128xf32> to vector<8x128xf32>
    %20 = arith.mulf %18, %19 : vector<8x128xf32>
    %21 = arith.addf %15, %20 : vector<8x128xf32>
    %22 = tpu.iota {dimensions = array<i32: 1>} : vector<1x128xi32>
    %c128_i32 = arith.constant 128 : i32
    %23 = arith.muli %arg0, %c128_i32 : i32
    %24 = vector.broadcast %23 : i32 to vector<1x128xi32>
    %25 = arith.addi %24, %22 : vector<1x128xi32>
    %c32_i32 = arith.constant 32 : i32
    %26 = vector.broadcast %c32_i32 : i32 to vector<1x128xi32>
    %27 = arith.cmpi slt, %25, %26 : vector<1x128xi32>
    %cst = arith.constant 0.000000e+00 : f32
    %28 = vector.shape_cast %27 : vector<1x128xi1> to vector<1x128xi1>
    %29 = vector.broadcast %28 : vector<1x128xi1> to vector<8x128xi1>
    %30 = vector.broadcast %cst : f32 to vector<8x128xf32>
    %31 = arith.select %29, %21, %30 : vector<8x128xi1>, vector<8x128xf32>
    %32 = arith.mulf %31, %31 : vector<8x128xf32>
    %c0_4 = arith.constant 0 : index
    %c0_5 = arith.constant 0 : index
    %c0_6 = arith.constant 0 : index
    %c0_7 = arith.constant 0 : index
    %33 = vector.load %arg3[%c0_4, %c0_5, %c0_6, %c0_7] : memref<1x2x8x128xf32, #tpu.memory_space<vmem>>, vector<1x1x8x128xf32>
    %34 = vector.shape_cast %33 : vector<1x1x8x128xf32> to vector<8x128xf32>
    %35 = vector.shape_cast %31 : vector<8x128xf32> to vector<1x1x8x128xf32>
    tpu.vector_store %arg3[%c0_4, %c0_5, %c0_6, %c0_7], %35 {strides = array<i32>} : memref<1x2x8x128xf32, #tpu.memory_space<vmem>>, vector<1x1x8x128xf32>,
    %c0_8 = arith.constant 0 : index
    %c1 = arith.constant 1 : index
    %c0_9 = arith.constant 0 : index
    %c0_10 = arith.constant 0 : index
    %36 = vector.load %arg3[%c0_8, %c1, %c0_9, %c0_10] : memref<1x2x8x128xf32, #tpu.memory_space<vmem>>, vector<1x1x8x128xf32>
    %37 = vector.shape_cast %36 : vector<1x1x8x128xf32> to vector<8x128xf32>
    %38 = vector.shape_cast %32 : vector<8x128xf32> to vector<1x1x8x128xf32>
    tpu.vector_store %arg3[%c0_8, %c1, %c0_9, %c0_10], %38 {strides = array<i32>} : memref<1x2x8x128xf32, #tpu.memory_space<vmem>>, vector<1x1x8x128xf32>,
    return
  }
  func.func @transform_0(%arg0: i32) -> (i32, i32) {
    %c0_i32 = arith.constant 0 : i32
    %c0_i32_0 = arith.constant 0 : i32
    return %c0_i32, %arg0 : i32, i32
  }
  func.func @transform_1(%arg0: i32) -> (i32, i32) {
    %c0_i32 = arith.constant 0 : i32
    %c0_i32_0 = arith.constant 0 : i32
    %c0_i32_1 = arith.constant 0 : i32
    return %c0_i32, %c0_i32_0 : i32, i32
  }
  func.func @transform_2(%arg0: i32) -> (i32, i32, i32, i32) {
    %c0_i32 = arith.constant 0 : i32
    %c0_i32_0 = arith.constant 0 : i32
    %c0_i32_1 = arith.constant 0 : i32
    %c0_i32_2 = arith.constant 0 : i32
    return %arg0, %c0_i32, %c0_i32_0, %c0_i32_1 : i32, i32, i32, i32
  }
}

</mosaic_0001>

<llo_original>
// kernel: tpu_custom_call.1
$region0: #{tpu_custom_call.1}
  #allocation0 [shape = 'u32[]', space=smem, size = 0x4, offset = 0x4, fixed_abs, tag = 'smem constant byte address 0x4 - core index']
  #allocation1 [shape = 'u32[144,128]{1,0:T(1,128)}', space=vmem, size = 0x12000, scoped, tag = 'internal scratch']
  %s0 = inlined_call_operand.vmem [shape: f32[3,128], index: 0, kind: input, shape index: {}]
  %s1 = inlined_call_operand.vmem [shape: f32[8,4], index: 1, kind: input, shape index: {}]
  %s2 = inlined_call_operand.hbm [shape: f32[1,2,8,128], index: 2, kind: output, shape index: {}]
  %s3 = sld [smem:[#allocation0]]
  $region18: #{tpu_custom_call.1} parent=0
    _
  %s5 = ssub.s32 1, %s3
  %s6 = scalar_select 0, %s5, %s3
  $region1: #{tpu_custom_call.1} parent=0
    #allocation2 [shape = 'u8[8192]{0}', space=vmem, size = 0x2000, scoped, tag = 'output window, operand 0, single buffered']
    #allocation3 [shape = 's32[1]{0}', space=sflag, size = 0x4, scoped, tag = 'scoped memory for tpu_custom_call.1']
    %7 = vsyncpa [#allocation3], 0
    // Predicated region
    $region2: #{tpu_custom_call.1} parent=1 // pred_check
      _
    $region3: #{tpu_custom_call.1} parent=1 // pred_check_branch
      %9 = sbr.rel (0) target = $region5
    $region4: #{tpu_custom_call.1} parent=1 // pred_region
      _
    $region5: #{tpu_custom_call.1} parent=1 // pred_fallthru
      _
    // Predicated region
    $region6: #{tpu_custom_call.1} parent=1 // pred_check
      _
    $region7: #{tpu_custom_call.1} parent=1 // pred_check_branch
      %11 = sbr.rel (0) target = $region9
    $region8: #{tpu_custom_call.1} parent=1 // pred_region
      _
    $region9: #{tpu_custom_call.1} parent=1 // pred_fallthru
      _
    %v12 = vld [vmem:[%s0] sm:$0x7]
    %v13 = vld [vmem:[%s1] sm:$0xff]
    %15 = vset.pattern.permute.xlu0 0
    %16 = vperm.xlu0 %15, %v13
    %v17 = vpop.permute.xlu0 %16
    %v19 = vlaneseq
    %v20 = vshrl.u32 %v19, 7
    %v21 = vsub.s32 0, %v20
    %v22 = vrot.slane %v12, %v21
    %v23 = vmul.f32 %v17, %v22
    %24 = vset.pattern.permute.xlu0 3
    %25 = vperm.xlu0 %24, %v13
    %v26 = vpop.permute.xlu0 %25
    %v28 = vadd.f32 %v26, %v23
    %29 = vset.pattern.permute.xlu0 1
    %30 = vperm.xlu0 %29, %v13
    %v31 = vpop.permute.xlu0 %30
    %v33 = vlaneseq
    %v34 = vshrl.u32 %v33, 7
    %v35 = vsub.s32 1, %v34
    %v36 = vrot.slane %v12, %v35
    %v37 = vmul.f32 %v31, %v36
    %v38 = vadd.f32 %v28, %v37
    %39 = vset.pattern.permute.xlu0 2
    %40 = vperm.xlu0 %39, %v13
    %v41 = vpop.permute.xlu0 %40
    %v43 = vlaneseq
    %v44 = vshrl.u32 %v43, 7
    %v45 = vsub.s32 2, %v44
    %v46 = vrot.slane %v12, %v45
    %v47 = vmul.f32 %v41, %v46
    %v48 = vadd.f32 %v38, %v47
    %v49 = vlaneseq
    %v50 = vand.u32 %v49, 127
    %s51 = smul.u32 0, 128
    %v52 = vstv %s51
    %v53 = vadd.s32 %v52, %v50
    %vm54 = vcmp.lt.s32.totalorder %v53, 32
    %v55 = vsel %vm54, 1, 0
    %vm56 = vcmp.eq.s32.totalorder %v55, 1
    %v57 = vsel %vm56, %v48, 0.0
    %v58 = vmul.f32 %v57, %v57
    %59 = vst [vmem:[#allocation2] sm:$0xff] %v57
    %s60 = scalar_lea.vmem [#allocation2], 8
    %61 = vst [vmem:[%s60] sm:$0xff] %v58
    // Predicated region
    $region10: #{tpu_custom_call.1} parent=1 // pred_check
      _
    $region11: #{tpu_custom_call.1} parent=1 // pred_check_branch
      %63 = sbr.rel (0) target = $region13
    $region12: #{tpu_custom_call.1} parent=1 // pred_region
      %s65 = ssub.s32 256, 256
      %66 = vsyncadd [#allocation3], %s65
      %s67 = sshll.u32 [#allocation2], 4
      %s68 = int_to_ptr.vmem [resolvable:$true] %s67
      %73 = dma.vmem_to_hbm [thread:$0]  %s68, 256, %s2, [#allocation3], 128, 128, 8
    $region13: #{tpu_custom_call.1} parent=1 // pred_fallthru
      _
    // Predicated region
    $region14: #{tpu_custom_call.1} parent=1 // pred_check
      _
    $region15: #{tpu_custom_call.1} parent=1 // pred_check_branch
      %75 = sbr.rel (0) target = $region17
    $region16: #{tpu_custom_call.1} parent=1 // pred_region
      %76 = dma.done [#allocation3], 256
    $region17: #{tpu_custom_call.1} parent=1 // pred_fallthru
      _
    %77 = vsyncpa [#allocation3], 1

</llo_original>
